<compile_context>
chip_gen: v7x
topology: tpu7x:2x2x1
jax: 0.10.0
libtpu: 0.0.40
codegen_flags: <defaults>
</compile_context>

<pallas_src>
import math
import functools

import jax
import jax.numpy as jnp
from jax import lax
from jax.experimental import pallas as pl
from jax.experimental.pallas import tpu as pltpu


def _round_up(x, m):
    return ((x + m - 1) // m) * m


def _gat_kernel(mask_ref, xq_ref, xkv_ref,
                wq_ref, bq_ref, wk_ref, bk_ref, wv_ref, bv_ref,
                out_ref, *, nhead, dqp, dvp):
    xq = xq_ref[...]      # (TQ, in_feats)     bf16 — this tile's query rows
    xkv = xkv_ref[...]    # (N,  in_feats)     bf16 — all nodes (keys / values)
    mask = mask_ref[...]  # (TQ, N)            f32  — precomputed (edge.T - 1) * 1e4

    # One wide projection matmul per Q/K/V covering every head (head columns are
    # zero-padded to 128 lanes, so per-head slices below are lane-aligned).
    # The 1/sqrt(att_features) scale is already folded into wq/bq.
    q_all = (jnp.dot(xq, wq_ref[...], preferred_element_type=jnp.float32)
             + bq_ref[...]).astype(jnp.bfloat16)          # (TQ, nhead*dqp)
    k_all = (jnp.dot(xkv, wk_ref[...], preferred_element_type=jnp.float32)
             + bk_ref[...]).astype(jnp.bfloat16)          # (N,  nhead*dqp)
    v_all = (jnp.dot(xkv, wv_ref[...], preferred_element_type=jnp.float32)
             + bv_ref[...]).astype(jnp.bfloat16)          # (N,  nhead*dvp)

    ctxs = []
    for h in range(nhead):  # static unroll; nhead is small
        qh = q_all[:, h * dqp:(h + 1) * dqp]   # 128-lane aligned slices: no relayout
        kh = k_all[:, h * dqp:(h + 1) * dqp]
        vh = v_all[:, h * dvp:(h + 1) * dvp]

        # scores = q @ k^T (contract the padded 128-lane head dim; padded lanes
        # contribute 0), bf16 in / f32 accumulate on the MXU.
        s = lax.dot_general(qh, kh, (((1,), (1,)), ((), ())),
                            preferred_element_type=jnp.float32)
        s = s + mask

        # Numerically-stable softmax over the key axis (kept in f32).
        s = s - jnp.max(s, axis=-1, keepdims=True)
        e = jnp.exp(s)
        p = e * pl.reciprocal(jnp.sum(e, axis=-1, keepdims=True), approx=True)

        # TODO(synk): attn dropout (p=0.1) is identity in eval mode; not applied.

        ctxs.append(jnp.dot(p.astype(jnp.bfloat16), vh,
                            preferred_element_type=jnp.float32))

    # Single lane-dense store of the whole (TQ, nhead*dvp) output slab.
    out_ref[...] = jnp.concatenate(ctxs, axis=-1)


def _pad_heads(w_t, b, nhead, d_pad, scale=1.0):
    """(in_feats, nhead*d) weight + (1, nhead*d) bias -> 128-lane-padded slabs
    of shape (in_feats, nhead*d_pad) / (1, nhead*d_pad), optionally pre-scaled."""
    in_feats, total = w_t.shape
    d = total // nhead
    w = (w_t.reshape(in_feats, nhead, d) * scale)
    w = jnp.pad(w, ((0, 0), (0, 0), (0, d_pad - d))).reshape(in_feats, nhead * d_pad)
    bias = (b.reshape(1, nhead, d) * scale)
    bias = jnp.pad(bias, ((0, 0), (0, 0), (0, d_pad - d))).reshape(1, nhead * d_pad)
    return w.astype(jnp.bfloat16), bias.astype(jnp.float32)


def gat_layer_forward(x, wq_t, bq, wk_t, bk, wv_t, bv, edge, *, nhead, tile_q=None):
    """x: (N, in_feats); w*_t: (in_feats, nhead*d) pre-transposed nn.Linear weights;
    b*: (1, nhead*d); edge: (N, N) binary adjacency (i.e. graph.edge[idx])."""
    n, in_feats = x.shape
    dq = wq_t.shape[1] // nhead
    dv = wv_t.shape[1] // nhead
    dqp = _round_up(dq, 128)
    dvp = _round_up(dv, 128)

    if tile_q is None:
        # Single tile for small graphs; cap the tile for large N so the
        # (TQ, N) score/mask working set stays inside VMEM (64 MiB on v7x).
        tile_q = n if n <= 256 else 128
    tile_q = min(tile_q, n)
    grid = (pl.cdiv(n, tile_q),)

    # Precompute the attention mask once in XLA (no in-kernel transpose).
    mask = (edge.T.astype(jnp.float32) - 1.0) * 10000.0

    # Fold the 1/sqrt(att_features) scale into Wq / bq (free: done once in XLA).
    scale = 1.0 / math.sqrt(dq)
    wq_h, bq_h = _pad_heads(wq_t, bq, nhead, dqp, scale=scale)
    wk_h, bk_h = _pad_heads(wk_t, bk, nhead, dqp)
    wv_h, bv_h = _pad_heads(wv_t, bv, nhead, dvp)

    x_bf = x.astype(jnp.bfloat16)

    kernel = functools.partial(_gat_kernel, nhead=nhead, dqp=dqp, dvp=dvp)

    const = lambda *shape: pl.BlockSpec(shape, lambda i: (0,) * len(shape))

    flops = 2 * n * in_feats * nhead * (2 * dqp + dvp) + 2 * nhead * n * n * (dqp + dvp)
    cost = pl.CostEstimate(flops=flops,
                           transcendentals=nhead * n * n,
                           bytes_accessed=4 * (x.size + edge.size + n * nhead * dv))

    padded = pl.pallas_call(
        kernel,
        out_shape=jax.ShapeDtypeStruct((n, nhead * dvp), jnp.float32),
        grid_spec=pltpu.PrefetchScalarGridSpec(
            num_scalar_prefetch=0,
            grid=grid,
            in_specs=[
                pl.BlockSpec((tile_q, n), lambda i: (i, 0)),          # mask tile
                pl.BlockSpec((tile_q, in_feats), lambda i: (i, 0)),   # x (query rows)
                const(n, in_feats),                                   # x (keys/values)
                const(in_feats, nhead * dqp), const(1, nhead * dqp),  # Wq, bq (pre-scaled)
                const(in_feats, nhead * dqp), const(1, nhead * dqp),  # Wk, bk
                const(in_feats, nhead * dvp), const(1, nhead * dvp),  # Wv, bv
            ],
            out_specs=pl.BlockSpec((tile_q, nhead * dvp), lambda i: (i, 0)),
        ),
        compiler_params=pltpu.CompilerParams(
            dimension_semantics=("parallel",),
            vmem_limit_bytes=32 * 1024 * 1024),
        cost_estimate=cost,
    )(mask, x_bf, x_bf, wq_h, bq_h, wk_h, bk_h, wv_h, bv_h)

    # Drop the per-head lane padding: head h's context is columns
    # [h*dvp, h*dvp + dv).  Column ordering matches PyTorch's
    # context.permute(1, 0, 2).contiguous().view(N, -1).
    return jnp.concatenate(
        [padded[:, h * dvp:h * dvp + dv] for h in range(nhead)], axis=-1)


def _ref_forward(x, wq_t, bq, wk_t, bk, wv_t, bv, edge, *, nhead):
    """Pure-JAX (f32) reference mirroring the PyTorch forward."""
    n = x.shape[0]
    dq = wq_t.shape[1] // nhead
    dv = wv_t.shape[1] // nhead
    q = (x @ wq_t + bq).reshape(n, nhead, dq).transpose(1, 0, 2)
    k = (x @ wk_t + bk).reshape(n, nhead, dq).transpose(1, 0, 2)
    v = (x @ wv_t + bv).reshape(n, nhead, dv).transpose(1, 0, 2)
    mask = (edge.T - 1.0) * 10000.0
    s = jnp.einsum('hnd,hmd->hnm', q, k) / math.sqrt(dq) + mask[None]
    p = jax.nn.softmax(s, axis=-1)
    ctx = jnp.einsum('hnm,hmd->hnd', p, v)
    return ctx.transpose(1, 0, 2).reshape(n, nhead * dv)


if __name__ == "__main__":
    # Module config: GATLayer(in_feats=32, out_feats=32, nhead=2) -> dq = dv = 16
    N, IN_FEATS, OUT_FEATS, NHEAD = 16, 32, 32, 2
    ATT_FEATS = OUT_FEATS  # atten_feats defaults to out_feats

    key = jax.random.PRNGKey(0)
    kx, ke, kwq, kbq, kwk, kbk, kwv, kbv = jax.random.split(key, 8)

    # Deterministic nn.Linear-style init: U(-1/sqrt(in), 1/sqrt(in)).
    bound = 1.0 / math.sqrt(IN_FEATS)
    wq_t = jax.random.uniform(kwq, (IN_FEATS, ATT_FEATS), jnp.float32, -bound, bound)
    bq = jax.random.uniform(kbq, (1, ATT_FEATS), jnp.float32, -bound, bound)
    wk_t = jax.random.uniform(kwk, (IN_FEATS, ATT_FEATS), jnp.float32, -bound, bound)
    bk = jax.random.uniform(kbk, (1, ATT_FEATS), jnp.float32, -bound, bound)
    wv_t = jax.random.uniform(kwv, (IN_FEATS, OUT_FEATS), jnp.float32, -bound, bound)
    bv = jax.random.uniform(kbv, (1, OUT_FEATS), jnp.float32, -bound, bound)

    # Node features.
    x = jax.random.normal(kx, (N, IN_FEATS), jnp.float32)

    # graph.edge is a stack of binary adjacency matrices; `idx` selects one.
    num_graphs, idx = 3, 1
    edges = (jax.random.uniform(ke, (num_graphs, N, N)) > 0.5).astype(jnp.float32)
    edge = edges[idx]  # (N, N), glue-side indexing of graph.edge[idx]

    # tile_q=8 exercises a 2-step query-tiled ("parallel") grid at this size.
    out = gat_layer_forward(x, wq_t, bq, wk_t, bk, wv_t, bv, edge,
                            nhead=NHEAD, tile_q=8)
    out = jax.block_until_ready(out)

    ref = _ref_forward(x, wq_t, bq, wk_t, bk, wv_t, bv, edge, nhead=NHEAD)
    assert out.shape == (N, OUT_FEATS)
    # bf16 MXU inputs + approx reciprocal -> loosened tolerance vs the f32 reference.
    assert jnp.allclose(out, ref, atol=3e-2, rtol=3e-2), "mismatch vs reference"

    print("KERNEL_OK")
</pallas_src>

<mosaic_0001>
module attributes {stable_mosaic.version = 11 : i64} {
  func.func @_gat_kernel(%arg0: i32, %arg1: memref<8x16xf32, #tpu.memory_space<vmem>>, %arg2: memref<8x32xbf16, #tpu.memory_space<vmem>>, %arg3: memref<16x32xbf16, #tpu.memory_space<vmem>>, %arg4: memref<32x256xbf16, #tpu.memory_space<vmem>>, %arg5: memref<1x256xf32, #tpu.memory_space<vmem>>, %arg6: memref<32x256xbf16, #tpu.memory_space<vmem>>, %arg7: memref<1x256xf32, #tpu.memory_space<vmem>>, %arg8: memref<32x256xbf16, #tpu.memory_space<vmem>>, %arg9: memref<1x256xf32, #tpu.memory_space<vmem>>, %arg10: memref<8x256xf32, #tpu.memory_space<vmem>>) attributes {dimension_semantics = [#tpu.dimension_semantics<parallel>], iteration_bounds = array<i64: 2>, scalar_prefetch = 0 : i64, scratch_operands = 0 : i64, tpu.core_type = #tpu.core_type<tc>, window_params = [{transform_indices = @transform_0, window_bounds = array<i64: 8, 16>}, {transform_indices = @transform_1, window_bounds = array<i64: 8, 32>}, {pipeline_mode = #tpu.pipeline_mode<synchronous>, transform_indices = @transform_2, window_bounds = array<i64: 16, 32>}, {pipeline_mode = #tpu.pipeline_mode<synchronous>, transform_indices = @transform_3, window_bounds = array<i64: 32, 256>}, {pipeline_mode = #tpu.pipeline_mode<synchronous>, transform_indices = @transform_4, window_bounds = array<i64: 1, 256>}, {pipeline_mode = #tpu.pipeline_mode<synchronous>, transform_indices = @transform_5, window_bounds = array<i64: 32, 256>}, {pipeline_mode = #tpu.pipeline_mode<synchronous>, transform_indices = @transform_6, window_bounds = array<i64: 1, 256>}, {pipeline_mode = #tpu.pipeline_mode<synchronous>, transform_indices = @transform_7, window_bounds = array<i64: 32, 256>}, {pipeline_mode = #tpu.pipeline_mode<synchronous>, transform_indices = @transform_8, window_bounds = array<i64: 1, 256>}, {transform_indices = @transform_9, window_bounds = array<i64: 8, 256>}]} {
    %c0 = arith.constant 0 : index
    %c0_0 = arith.constant 0 : index
    %0 = vector.load %arg2[%c0, %c0_0] : memref<8x32xbf16, #tpu.memory_space<vmem>>, vector<8x32xbf16>
    %c0_1 = arith.constant 0 : index
    %c0_2 = arith.constant 0 : index
    %1 = vector.load %arg3[%c0_1, %c0_2] : memref<16x32xbf16, #tpu.memory_space<vmem>>, vector<16x32xbf16>
    %c0_3 = arith.constant 0 : index
    %c0_4 = arith.constant 0 : index
    %2 = vector.load %arg1[%c0_3, %c0_4] : memref<8x16xf32, #tpu.memory_space<vmem>>, vector<8x16xf32>
    %c0_5 = arith.constant 0 : index
    %c0_6 = arith.constant 0 : index
    %3 = vector.load %arg4[%c0_5, %c0_6] : memref<32x256xbf16, #tpu.memory_space<vmem>>, vector<32x256xbf16>
    %cst = arith.constant dense<0.000000e+00> : vector<8x256xf32>
    %4 = tpu.matmul %0, %3, %cst {dimension_numbers = #tpu.dot_dimension_numbers<[1], [0], [0], [1], [0, 0, 1, 1], [], []>} : vector<8x32xbf16>, vector<32x256xbf16>, vector<8x256xf32> -> vector<8x256xf32>
    %c0_7 = arith.constant 0 : index
    %c0_8 = arith.constant 0 : index
    %5 = vector.load %arg5[%c0_7, %c0_8] : memref<1x256xf32, #tpu.memory_space<vmem>>, vector<1x256xf32>
    %6 = vector.broadcast %5 : vector<1x256xf32> to vector<8x256xf32>
    %7 = arith.addf %4, %6 : vector<8x256xf32>
    %8 = arith.truncf %7 : vector<8x256xf32> to vector<8x256xbf16>
    %c0_9 = arith.constant 0 : index
    %c0_10 = arith.constant 0 : index
    %9 = vector.load %arg6[%c0_9, %c0_10] : memref<32x256xbf16, #tpu.memory_space<vmem>>, vector<32x256xbf16>
    %cst_11 = arith.constant dense<0.000000e+00> : vector<16x256xf32>
    %10 = tpu.matmul %1, %9, %cst_11 {dimension_numbers = #tpu.dot_dimension_numbers<[1], [0], [0], [1], [0, 0, 1, 1], [], []>} : vector<16x32xbf16>, vector<32x256xbf16>, vector<16x256xf32> -> vector<16x256xf32>
    %c0_12 = arith.constant 0 : index
    %c0_13 = arith.constant 0 : index
    %11 = vector.load %arg7[%c0_12, %c0_13] : memref<1x256xf32, #tpu.memory_space<vmem>>, vector<1x256xf32>
    %12 = vector.broadcast %11 : vector<1x256xf32> to vector<16x256xf32>
    %13 = arith.addf %10, %12 : vector<16x256xf32>
    %14 = arith.truncf %13 : vector<16x256xf32> to vector<16x256xbf16>
    %c0_14 = arith.constant 0 : index
    %c0_15 = arith.constant 0 : index
    %15 = vector.load %arg8[%c0_14, %c0_15] : memref<32x256xbf16, #tpu.memory_space<vmem>>, vector<32x256xbf16>
    %cst_16 = arith.constant dense<0.000000e+00> : vector<16x256xf32>
    %16 = tpu.matmul %1, %15, %cst_16 {dimension_numbers = #tpu.dot_dimension_numbers<[1], [0], [0], [1], [0, 0, 1, 1], [], []>} : vector<16x32xbf16>, vector<32x256xbf16>, vector<16x256xf32> -> vector<16x256xf32>
    %c0_17 = arith.constant 0 : index
    %c0_18 = arith.constant 0 : index
    %17 = vector.load %arg9[%c0_17, %c0_18] : memref<1x256xf32, #tpu.memory_space<vmem>>, vector<1x256xf32>
    %18 = vector.broadcast %17 : vector<1x256xf32> to vector<16x256xf32>
    %19 = arith.addf %16, %18 : vector<16x256xf32>
    %20 = arith.truncf %19 : vector<16x256xf32> to vector<16x256xbf16>
    %21 = vector.extract_strided_slice %8 {offsets = [0, 0], sizes = [8, 128], strides = [1, 1]} : vector<8x256xbf16> to vector<8x128xbf16>
    %22 = vector.extract_strided_slice %14 {offsets = [0, 0], sizes = [16, 128], strides = [1, 1]} : vector<16x256xbf16> to vector<16x128xbf16>
    %23 = vector.extract_strided_slice %20 {offsets = [0, 0], sizes = [16, 128], strides = [1, 1]} : vector<16x256xbf16> to vector<16x128xbf16>
    %cst_19 = arith.constant dense<0.000000e+00> : vector<8x16xf32>
    %24 = tpu.matmul %21, %22, %cst_19 {dimension_numbers = #tpu.dot_dimension_numbers<[1], [1], [0], [0], [0, 0, 1, 0], [], []>} : vector<8x128xbf16>, vector<16x128xbf16>, vector<8x16xf32> -> vector<8x16xf32>
    %25 = arith.addf %24, %2 : vector<8x16xf32>
    %cst_20 = arith.constant dense<0xFF800000> : vector<8xf32>
    %26 = vector.multi_reduction <maximumf>, %25, %cst_20 [1] : vector<8x16xf32> to vector<8xf32>
    %27 = vector.shape_cast %26 : vector<8xf32> to vector<8x1xf32>
    %28 = vector.broadcast %27 : vector<8x1xf32> to vector<8x16xf32>
    %29 = arith.subf %25, %28 : vector<8x16xf32>
    %30 = math.exp %29 : vector<8x16xf32>
    %cst_21 = arith.constant dense<0.000000e+00> : vector<8xf32>
    %31 = vector.multi_reduction <add>, %30, %cst_21 [1] : vector<8x16xf32> to vector<8xf32>
    %32 = vector.shape_cast %31 : vector<8xf32> to vector<8x1xf32>
    %33 = tpu.reciprocal %32 {approx = true} : vector<8x1xf32> -> vector<8x1xf32>
    %34 = vector.broadcast %33 : vector<8x1xf32> to vector<8x16xf32>
    %35 = arith.mulf %30, %34 : vector<8x16xf32>
    %36 = arith.truncf %35 : vector<8x16xf32> to vector<8x16xbf16>
    %cst_22 = arith.constant dense<0.000000e+00> : vector<8x128xf32>
    %37 = tpu.matmul %36, %23, %cst_22 {dimension_numbers = #tpu.dot_dimension_numbers<[1], [0], [0], [1], [0, 0, 1, 1], [], []>} : vector<8x16xbf16>, vector<16x128xbf16>, vector<8x128xf32> -> vector<8x128xf32>
    %38 = vector.extract_strided_slice %8 {offsets = [0, 128], sizes = [8, 128], strides = [1, 1]} : vector<8x256xbf16> to vector<8x128xbf16>
    %39 = vector.extract_strided_slice %14 {offsets = [0, 128], sizes = [16, 128], strides = [1, 1]} : vector<16x256xbf16> to vector<16x128xbf16>
    %40 = vector.extract_strided_slice %20 {offsets = [0, 128], sizes = [16, 128], strides = [1, 1]} : vector<16x256xbf16> to vector<16x128xbf16>
    %cst_23 = arith.constant dense<0.000000e+00> : vector<8x16xf32>
    %41 = tpu.matmul %38, %39, %cst_23 {dimension_numbers = #tpu.dot_dimension_numbers<[1], [1], [0], [0], [0, 0, 1, 0], [], []>} : vector<8x128xbf16>, vector<16x128xbf16>, vector<8x16xf32> -> vector<8x16xf32>
    %42 = arith.addf %41, %2 : vector<8x16xf32>
    %cst_24 = arith.constant dense<0xFF800000> : vector<8xf32>
    %43 = vector.multi_reduction <maximumf>, %42, %cst_24 [1] : vector<8x16xf32> to vector<8xf32>
    %44 = vector.shape_cast %43 : vector<8xf32> to vector<8x1xf32>
    %45 = vector.broadcast %44 : vector<8x1xf32> to vector<8x16xf32>
    %46 = arith.subf %42, %45 : vector<8x16xf32>
    %47 = math.exp %46 : vector<8x16xf32>
    %cst_25 = arith.constant dense<0.000000e+00> : vector<8xf32>
    %48 = vector.multi_reduction <add>, %47, %cst_25 [1] : vector<8x16xf32> to vector<8xf32>
    %49 = vector.shape_cast %48 : vector<8xf32> to vector<8x1xf32>
    %50 = tpu.reciprocal %49 {approx = true} : vector<8x1xf32> -> vector<8x1xf32>
    %51 = vector.broadcast %50 : vector<8x1xf32> to vector<8x16xf32>
    %52 = arith.mulf %47, %51 : vector<8x16xf32>
    %53 = arith.truncf %52 : vector<8x16xf32> to vector<8x16xbf16>
    %cst_26 = arith.constant dense<0.000000e+00> : vector<8x128xf32>
    %54 = tpu.matmul %53, %40, %cst_26 {dimension_numbers = #tpu.dot_dimension_numbers<[1], [0], [0], [1], [0, 0, 1, 1], [], []>} : vector<8x16xbf16>, vector<16x128xbf16>, vector<8x128xf32> -> vector<8x128xf32>
    %55 = tpu.concatenate %37, %54 in 1 : vector<8x128xf32>, vector<8x128xf32> -> vector<8x256xf32>
    %c0_27 = arith.constant 0 : index
    %c0_28 = arith.constant 0 : index
    %56 = vector.load %arg10[%c0_27, %c0_28] : memref<8x256xf32, #tpu.memory_space<vmem>>, vector<8x256xf32>
    tpu.vector_store %arg10[%c0_27, %c0_28], %55 {strides = array<i32>} : memref<8x256xf32, #tpu.memory_space<vmem>>, vector<8x256xf32>,
    return
  }
  func.func @transform_0(%arg0: i32) -> (i32, i32) {
    %c0_i32 = arith.constant 0 : i32
    %c0_i32_0 = arith.constant 0 : i32
    return %arg0, %c0_i32 : i32, i32
  }
  func.func @transform_1(%arg0: i32) -> (i32, i32) {
    %c0_i32 = arith.constant 0 : i32
    %c0_i32_0 = arith.constant 0 : i32
    return %arg0, %c0_i32 : i32, i32
  }
  func.func @transform_2(%arg0: i32) -> (i32, i32) {
    %c0_i32 = arith.constant 0 : i32
    %c0_i32_0 = arith.constant 0 : i32
    %c0_i32_1 = arith.constant 0 : i32
    return %c0_i32, %c0_i32_0 : i32, i32
  }
  func.func @transform_3(%arg0: i32) -> (i32, i32) {
    %c0_i32 = arith.constant 0 : i32
    %c0_i32_0 = arith.constant 0 : i32
    %c0_i32_1 = arith.constant 0 : i32
    return %c0_i32, %c0_i32_0 : i32, i32
  }
  func.func @transform_4(%arg0: i32) -> (i32, i32) {
    %c0_i32 = arith.constant 0 : i32
    %c0_i32_0 = arith.constant 0 : i32
    %c0_i32_1 = arith.constant 0 : i32
    return %c0_i32, %c0_i32_0 : i32, i32
  }
  func.func @transform_5(%arg0: i32) -> (i32, i32) {
    %c0_i32 = arith.constant 0 : i32
    %c0_i32_0 = arith.constant 0 : i32
    %c0_i32_1 = arith.constant 0 : i32
    return %c0_i32, %c0_i32_0 : i32, i32
  }
  func.func @transform_6(%arg0: i32) -> (i32, i32) {
    %c0_i32 = arith.constant 0 : i32
    %c0_i32_0 = arith.constant 0 : i32
    %c0_i32_1 = arith.constant 0 : i32
    return %c0_i32, %c0_i32_0 : i32, i32
  }
  func.func @transform_7(%arg0: i32) -> (i32, i32) {
    %c0_i32 = arith.constant 0 : i32
    %c0_i32_0 = arith.constant 0 : i32
    %c0_i32_1 = arith.constant 0 : i32
    return %c0_i32, %c0_i32_0 : i32, i32
  }
  func.func @transform_8(%arg0: i32) -> (i32, i32) {
    %c0_i32 = arith.constant 0 : i32
    %c0_i32_0 = arith.constant 0 : i32
    %c0_i32_1 = arith.constant 0 : i32
    return %c0_i32, %c0_i32_0 : i32, i32
  }
  func.func @transform_9(%arg0: i32) -> (i32, i32) {
    %c0_i32 = arith.constant 0 : i32
    %c0_i32_0 = arith.constant 0 : i32
    return %arg0, %c0_i32 : i32, i32
  }
}

</mosaic_0001>

<llo_original>
// kernel: tpu_custom_call.1
$region0: #{tpu_custom_call.1}
  #allocation0 [shape = 'u32[]', space=smem, size = 0x4, offset = 0x4, fixed_abs, tag = 'smem constant byte address 0x4 - core index']
  #allocation1 [shape = 'u32[144,128]{1,0:T(1,128)}', space=vmem, size = 0x12000, scoped, tag = 'internal scratch']
  %s0 = inlined_call_operand.hbm [shape: f32[16,16], index: 0, kind: input, shape index: {}]
  %s1 = inlined_call_operand.hbm [shape: bf16[16,32], index: 1, kind: input, shape index: {}]
  %s2 = inlined_call_operand.hbm [shape: bf16[16,32], index: 2, kind: input, shape index: {}]
  %s3 = inlined_call_operand.hbm [shape: bf16[32,256], index: 3, kind: input, shape index: {}]
  %s4 = inlined_call_operand.vmem [shape: f32[1,256], index: 4, kind: input, shape index: {}]
  %s5 = inlined_call_operand.hbm [shape: bf16[32,256], index: 5, kind: input, shape index: {}]
  %s6 = inlined_call_operand.vmem [shape: f32[1,256], index: 6, kind: input, shape index: {}]
  %s7 = inlined_call_operand.hbm [shape: bf16[32,256], index: 7, kind: input, shape index: {}]
  %s8 = inlined_call_operand.vmem [shape: f32[1,256], index: 8, kind: input, shape index: {}]
  %s9 = inlined_call_operand.hbm [shape: f32[16,256], index: 9, kind: output, shape index: {}]
  %s10 = sld [smem:[#allocation0]]
  $region93: #{tpu_custom_call.1} parent=0
    _
  %s12 = ssub.s32 1, %s10
  %s13 = scalar_select 0, %s12, %s10
  $region1: #{tpu_custom_call.1} parent=0
    #allocation2 [shape = 'u8[8192]{0}', space=vmem, size = 0x2000, scoped, tag = 'input window, operand 0']
    #allocation3 [shape = 's32[2]{0}', space=sflag, size = 0x8, scoped, tag = 'scoped memory for tpu_custom_call.1']
    #allocation4 [shape = 's32[2]{0}', space=sflag, size = 0x8, scoped, tag = 'scoped memory for tpu_custom_call.1']
    #allocation5 [shape = 'u8[4096]{0}', space=vmem, size = 0x1000, scoped, tag = 'input window, operand 1']
    #allocation6 [shape = 's32[2]{0}', space=sflag, size = 0x8, scoped, tag = 'scoped memory for tpu_custom_call.1']
    #allocation7 [shape = 'u8[4096]{0}', space=vmem, size = 0x1000, scoped, tag = 'input window, operand 2, single buffered']
    #allocation8 [shape = 'u8[16384]{0}', space=vmem, size = 0x4000, scoped, tag = 'input window, operand 3, single buffered']
    #allocation9 [shape = 's32[1]{0}', space=sflag, size = 0x4, scoped, tag = 'scoped memory for tpu_custom_call.1']
    #allocation10 [shape = 'u8[16384]{0}', space=vmem, size = 0x4000, scoped, tag = 'input window, operand 5, single buffered']
    #allocation11 [shape = 'u8[16384]{0}', space=vmem, size = 0x4000, scoped, tag = 'input window, operand 7, single buffered']
    #allocation12 [shape = 's32[1]{0}', space=sflag, size = 0x4, scoped, tag = 'scoped memory for tpu_custom_call.1']
    #allocation13 [shape = 'u8[16384]{0}', space=vmem, size = 0x4000, scoped, tag = 'output window, operand 0']
    %14 = vsyncpa [#allocation3], 0
    %s15 = scalar_lea.sflag [#allocation3], 1
    %16 = vsyncpa %s15, 0
    %17 = vsyncpa [#allocation6], 0
    %s18 = scalar_lea.sflag [#allocation6], 1
    %19 = vsyncpa %s18, 0
    %20 = vsyncpa [#allocation9], 0
    %21 = vsyncpa [#allocation12], 0
    %22 = vsyncpa [#allocation4], 0
    %s23 = scalar_lea.sflag [#allocation4], 1
    %24 = vsyncpa %s23, 0
    loop: start=0, step=1, limit=4
    $region2: #{tpu_custom_call.1} parent=1 // loop_pre_header
      _
    $region3: #{tpu_custom_call.1} parent=1 // loop_header
      %s26 = sphi 0, %s30
      %p27 = scmp.ge.s32.totalorder %s26, 4
      %s36 = sphi 0, %s38
      %s39 = sphi 0, %s36
      %s40 = sphi 0, %s39
      %s56 = sphi 0, %s40
      %s62 = sphi 0, %s64
      %s65 = sphi 0, %s62
      %s66 = sphi 0, %s65
      %s82 = sphi 0, %s66
      %s86 = sphi 0, %s86
      %s88 = sphi 0, %s86
      %s89 = sphi 0, %s88
      %s103 = sphi 0, %s89
      %s107 = sphi 0, %s107
      %s109 = sphi 0, %s107
      %s110 = sphi 0, %s109
      %s124 = sphi 0, %s110
      %s128 = sphi 0, %s128
      %s130 = sphi 0, %s128
      %s131 = sphi 0, %s130
      %s145 = sphi 0, %s131
      %s149 = sphi 0, %s149
      %s151 = sphi 0, %s149
      %s152 = sphi 0, %s151
      %s166 = sphi 0, %s152
      %s170 = sphi 0, %s170
      %s172 = sphi 0, %s170
      %s173 = sphi 0, %s172
      %s187 = sphi 0, %s173
      %s191 = sphi 0, %s191
      %s193 = sphi 0, %s191
      %s194 = sphi 0, %s193
      %s208 = sphi 0, %s194
      %s212 = sphi 0, %s212
      %s214 = sphi 0, %s212
      %s215 = sphi 0, %s214
      %s229 = sphi 0, %s215
      %s235 = sphi 0, %s237
      %s238 = sphi 0, %s235
      %s239 = sphi 0, %s238
      %s255 = sphi 0, %s239
    $region4: #{tpu_custom_call.1} parent=1 // loop_header_branch
      %29 = sbr.rel (%p27) target = $region8
    $region5: #{tpu_custom_call.1} parent=1 // loop_body
      %s31 = ssub.s32 %s26, 1
      %s32 = ssub.s32 %s26, 2
      %s33 = sadd.s32 %s26, 1
      %s34 = ssub.s32 %s26, %s33
      %p35 = scmp.eq.s32.totalorder %s34, 0
      %s37 = sadd.s32 %s36, 1
      %s38 = scalar_select %p35, %s36, %s37
      %p41 = pneg %p35
      %p42 = scmp.eq.s32.totalorder %s26, 1
      %p43 = por %p41, %p42
      %p44 = scmp.ne.s32.totalorder %s36, %s39
      %p45 = scmp.eq.s32.totalorder %s26, 0
      %p46 = por %p44, %p45
      %p47 = scmp.ne.s32.totalorder %s36, %s39
      %p48 = scmp.eq.s32.totalorder %s31, 1
      %p49 = por %p47, %p48
      %p50 = scmp.ne.s32.totalorder %s39, %s40
      %p51 = scmp.eq.s32.totalorder %s31, 0
      %p52 = por %p50, %p51
      %p53 = scmp.ne.s32.totalorder %s39, %s40
      %p54 = scmp.eq.s32.totalorder %s32, 1
      %p55 = por %p53, %p54
      %p57 = scmp.ne.s32.totalorder %s40, %s56
      %p58 = scmp.eq.s32.totalorder %s32, 0
      %p59 = por %p57, %p58
      %s60 = ssub.s32 %s26, %s33
      %p61 = scmp.eq.s32.totalorder %s60, 0
      %s63 = sadd.s32 %s62, 1
      %s64 = scalar_select %p61, %s62, %s63
      %p67 = pneg %p61
      %p68 = scmp.eq.s32.totalorder %s26, 1
      %p69 = por %p67, %p68
      %p70 = scmp.ne.s32.totalorder %s62, %s65
      %p71 = scmp.eq.s32.totalorder %s26, 0
      %p72 = por %p70, %p71
      %p73 = scmp.ne.s32.totalorder %s62, %s65
      %p74 = scmp.eq.s32.totalorder %s31, 1
      %p75 = por %p73, %p74
      %p76 = scmp.ne.s32.totalorder %s65, %s66
      %p77 = scmp.eq.s32.totalorder %s31, 0
      %p78 = por %p76, %p77
      %p79 = scmp.ne.s32.totalorder %s65, %s66
      %p80 = scmp.eq.s32.totalorder %s32, 1
      %p81 = por %p79, %p80
      %p83 = scmp.ne.s32.totalorder %s66, %s82
      %p84 = scmp.eq.s32.totalorder %s32, 0
      %p85 = por %p83, %p84
      %s87 = sadd.s32 %s86, 1
      %p90 = scmp.eq.s32.totalorder %s26, 1
      %p91 = scmp.ne.s32.totalorder %s86, %s88
      %p92 = scmp.eq.s32.totalorder %s26, 0
      %p93 = por %p91, %p92
      %p94 = scmp.ne.s32.totalorder %s86, %s88
      %p95 = scmp.eq.s32.totalorder %s31, 1
      %p96 = por %p94, %p95
      %p97 = scmp.ne.s32.totalorder %s88, %s89
      %p98 = scmp.eq.s32.totalorder %s31, 0
      %p99 = por %p97, %p98
      %p100 = scmp.ne.s32.totalorder %s88, %s89
      %p101 = scmp.eq.s32.totalorder %s32, 1
      %p102 = por %p100, %p101
      %p104 = scmp.ne.s32.totalorder %s89, %s103
      %p105 = scmp.eq.s32.totalorder %s32, 0
      %p106 = por %p104, %p105
      %s108 = sadd.s32 %s107, 1
      %p111 = scmp.eq.s32.totalorder %s26, 1
      %p112 = scmp.ne.s32.totalorder %s107, %s109
      %p113 = scmp.eq.s32.totalorder %s26, 0
      %p114 = por %p112, %p113
      %p115 = scmp.ne.s32.totalorder %s107, %s109
      %p116 = scmp.eq.s32.totalorder %s31, 1
      %p117 = por %p115, %p116
      %p118 = scmp.ne.s32.totalorder %s109, %s110
      %p119 = scmp.eq.s32.totalorder %s31, 0
      %p120 = por %p118, %p119
      %p121 = scmp.ne.s32.totalorder %s109, %s110
      %p122 = scmp.eq.s32.totalorder %s32, 1
      %p123 = por %p121, %p122
      %p125 = scmp.ne.s32.totalorder %s110, %s124
      %p126 = scmp.eq.s32.totalorder %s32, 0
      %p127 = por %p125, %p126
      %s129 = sadd.s32 %s128, 1
      %p132 = scmp.eq.s32.totalorder %s26, 1
      %p133 = scmp.ne.s32.totalorder %s128, %s130
      %p134 = scmp.eq.s32.totalorder %s26, 0
      %p135 = por %p133, %p134
      %p136 = scmp.ne.s32.totalorder %s128, %s130
      %p137 = scmp.eq.s32.totalorder %s31, 1
      %p138 = por %p136, %p137
      %p139 = scmp.ne.s32.totalorder %s130, %s131
      %p140 = scmp.eq.s32.totalorder %s31, 0
      %p141 = por %p139, %p140
      %p142 = scmp.ne.s32.totalorder %s130, %s131
      %p143 = scmp.eq.s32.totalorder %s32, 1
      %p144 = por %p142, %p143
      %p146 = scmp.ne.s32.totalorder %s131, %s145
      %p147 = scmp.eq.s32.totalorder %s32, 0
      %p148 = por %p146, %p147
      %s150 = sadd.s32 %s149, 1
      %p153 = scmp.eq.s32.totalorder %s26, 1
      %p154 = scmp.ne.s32.totalorder %s149, %s151
      %p155 = scmp.eq.s32.totalorder %s26, 0
      %p156 = por %p154, %p155
      %p157 = scmp.ne.s32.totalorder %s149, %s151
      %p158 = scmp.eq.s32.totalorder %s31, 1
      %p159 = por %p157, %p158
      %p160 = scmp.ne.s32.totalorder %s151, %s152
      %p161 = scmp.eq.s32.totalorder %s31, 0
      %p162 = por %p160, %p161
      %p163 = scmp.ne.s32.totalorder %s151, %s152
      %p164 = scmp.eq.s32.totalorder %s32, 1
      %p165 = por %p163, %p164
      %p167 = scmp.ne.s32.totalorder %s152, %s166
      %p168 = scmp.eq.s32.totalorder %s32, 0
      %p169 = por %p167, %p168
      %s171 = sadd.s32 %s170, 1
      %p174 = scmp.eq.s32.totalorder %s26, 1
      %p175 = scmp.ne.s32.totalorder %s170, %s172
      %p176 = scmp.eq.s32.totalorder %s26, 0
      %p177 = por %p175, %p176
      %p178 = scmp.ne.s32.totalorder %s170, %s172
      %p179 = scmp.eq.s32.totalorder %s31, 1
      %p180 = por %p178, %p179
      %p181 = scmp.ne.s32.totalorder %s172, %s173
      %p182 = scmp.eq.s32.totalorder %s31, 0
      %p183 = por %p181, %p182
      %p184 = scmp.ne.s32.totalorder %s172, %s173
      %p185 = scmp.eq.s32.totalorder %s32, 1
      %p186 = por %p184, %p185
      %p188 = scmp.ne.s32.totalorder %s173, %s187
      %p189 = scmp.eq.s32.totalorder %s32, 0
      %p190 = por %p188, %p189
      %s192 = sadd.s32 %s191, 1
      %p195 = scmp.eq.s32.totalorder %s26, 1
      %p196 = scmp.ne.s32.totalorder %s191, %s193
      %p197 = scmp.eq.s32.totalorder %s26, 0
      %p198 = por %p196, %p197
      %p199 = scmp.ne.s32.totalorder %s191, %s193
      %p200 = scmp.eq.s32.totalorder %s31, 1
      %p201 = por %p199, %p200
      %p202 = scmp.ne.s32.totalorder %s193, %s194
      %p203 = scmp.eq.s32.totalorder %s31, 0
      %p204 = por %p202, %p203
      %p205 = scmp.ne.s32.totalorder %s193, %s194
      %p206 = scmp.eq.s32.totalorder %s32, 1
      %p207 = por %p205, %p206
      %p209 = scmp.ne.s32.totalorder %s194, %s208
      %p210 = scmp.eq.s32.totalorder %s32, 0
      %p211 = por %p209, %p210
      %s213 = sadd.s32 %s212, 1
      %p216 = scmp.eq.s32.totalorder %s26, 1
      %p217 = scmp.ne.s32.totalorder %s212, %s214
      %p218 = scmp.eq.s32.totalorder %s26, 0
      %p219 = por %p217, %p218
      %p220 = scmp.ne.s32.totalorder %s212, %s214
      %p221 = scmp.eq.s32.totalorder %s31, 1
      %p222 = por %p220, %p221
      %p223 = scmp.ne.s32.totalorder %s214, %s215
      %p224 = scmp.eq.s32.totalorder %s31, 0
      %p225 = por %p223, %p224
      %p226 = scmp.ne.s32.totalorder %s214, %s215
      %p227 = scmp.eq.s32.totalorder %s32, 1
      %p228 = por %p226, %p227
      %p230 = scmp.ne.s32.totalorder %s215, %s229
      %p231 = scmp.eq.s32.totalorder %s32, 0
      %p232 = por %p230, %p231
      %s233 = ssub.s32 %s26, %s33
      %p234 = scmp.eq.s32.totalorder %s233, 0
      %s236 = sadd.s32 %s235, 1
      %s237 = scalar_select %p234, %s235, %s236
      %p240 = pneg %p234
      %p241 = scmp.eq.s32.totalorder %s26, 1
      %p242 = por %p240, %p241
      %p243 = scmp.ne.s32.totalorder %s235, %s238
      %p244 = scmp.eq.s32.totalorder %s26, 0
      %p245 = por %p243, %p244
      %p246 = scmp.ne.s32.totalorder %s235, %s238
      %p247 = scmp.eq.s32.totalorder %s31, 1
      %p248 = por %p246, %p247
      %p249 = scmp.ne.s32.totalorder %s238, %s239
      %p250 = scmp.eq.s32.totalorder %s31, 0
      %p251 = por %p249, %p250
      %p252 = scmp.ne.s32.totalorder %s238, %s239
      %p253 = scmp.eq.s32.totalorder %s32, 1
      %p254 = por %p252, %p253
      %p256 = scmp.ne.s32.totalorder %s239, %s255
      %p257 = scmp.eq.s32.totalorder %s32, 0
      %p258 = por %p256, %p257
      %p259 = scmp.le.s32.totalorder 1, %s26
      %p260 = scmp.lt.s32.totalorder %s26, 3
      %p261 = pnand %p259, %p260
      %p262 = pneg %p261
      // Predicated region
      $region9: #{tpu_custom_call.1} parent=5 // pred_check
        _
      $region10: #{tpu_custom_call.1} parent=5 // pred_check_branch
        %264 = sbr.rel (%p261) target = $region12
      $region11: #{tpu_custom_call.1} parent=5 // pred_region
        %s265 = ssub.s32 %s26, 1
        // Predicated region
        $region13: #{tpu_custom_call.1} parent=11 // pred_check
          %p266 = pneg %p99
        $region14: #{tpu_custom_call.1} parent=11 // pred_check_branch
          %268 = sbr.rel (%p266) target = $region16
        $region15: #{tpu_custom_call.1} parent=11 // pred_region
          %s270 = ssub.s32 128, 128
          %271 = vsyncadd [#allocation6], %s270
          %s272 = sshll.u32 [#allocation7], 4
          %s273 = int_to_ptr.vmem [resolvable:$true] %s272
          %278 = dma.hbm_to_vmem [thread:$0]  %s2, 128, %s273, [#allocation6], 64, 64, 4
        $region16: #{tpu_custom_call.1} parent=11 // pred_fallthru
          _
        // Predicated region
        $region17: #{tpu_custom_call.1} parent=11 // pred_check
          %p279 = pneg %p120
        $region18: #{tpu_custom_call.1} parent=11 // pred_check_branch
          %281 = sbr.rel (%p279) target = $region20
        $region19: #{tpu_custom_call.1} parent=11 // pred_region
          %s283 = ssub.s32 512, 512
          %284 = vsyncadd [#allocation9], %s283
          %s285 = sshll.u32 [#allocation8], 4
          %s286 = int_to_ptr.vmem [resolvable:$true] %s285
          %291 = dma.hbm_to_vmem [thread:$0]  %s3, 512, %s286, [#allocation9], 128, 128, 8
        $region20: #{tpu_custom_call.1} parent=11 // pred_fallthru
          _
        // Predicated region
        $region21: #{tpu_custom_call.1} parent=11 // pred_check
          %p292 = pneg %p141
        $region22: #{tpu_custom_call.1} parent=11 // pred_check_branch
          %294 = sbr.rel (%p292) target = $region24
        $region23: #{tpu_custom_call.1} parent=11 // pred_region
          _
        $region24: #{tpu_custom_call.1} parent=11 // pred_fallthru
          _
        // Predicated region
        $region25: #{tpu_custom_call.1} parent=11 // pred_check
          %p295 = pneg %p162
        $region26: #{tpu_custom_call.1} parent=11 // pred_check_branch
          %297 = sbr.rel (%p295) target = $region28
        $region27: #{tpu_custom_call.1} parent=11 // pred_region
          %s299 = ssub.s32 512, 512
          %300 = vsyncadd [#allocation9], %s299
          %s301 = sshll.u32 [#allocation10], 4
          %s302 = int_to_ptr.vmem [resolvable:$true] %s301
          %307 = dma.hbm_to_vmem [thread:$0]  %s5, 512, %s302, [#allocation9], 128, 128, 8
        $region28: #{tpu_custom_call.1} parent=11 // pred_fallthru
          _
        // Predicated region
        $region29: #{tpu_custom_call.1} parent=11 // pred_check
          %p308 = pneg %p183
        $region30: #{tpu_custom_call.1} parent=11 // pred_check_branch
          %310 = sbr.rel (%p308) target = $region32
        $region31: #{tpu_custom_call.1} parent=11 // pred_region
          _
        $region32: #{tpu_custom_call.1} parent=11 // pred_fallthru
          _
        // Predicated region
        $region33: #{tpu_custom_call.1} parent=11 // pred_check
          %p311 = pneg %p204
        $region34: #{tpu_custom_call.1} parent=11 // pred_check_branch
          %313 = sbr.rel (%p311) target = $region36
        $region35: #{tpu_custom_call.1} parent=11 // pred_region
          %s315 = ssub.s32 512, 512
          %316 = vsyncadd [#allocation12], %s315
          %s317 = sshll.u32 [#allocation11], 4
          %s318 = int_to_ptr.vmem [resolvable:$true] %s317
          %323 = dma.hbm_to_vmem [thread:$0]  %s7, 512, %s318, [#allocation12], 128, 128, 8
        $region36: #{tpu_custom_call.1} parent=11 // pred_fallthru
          _
        // Predicated region
        $region37: #{tpu_custom_call.1} parent=11 // pred_check
          %p324 = pneg %p225
        $region38: #{tpu_custom_call.1} parent=11 // pred_check_branch
          %326 = sbr.rel (%p324) target = $region40
        $region39: #{tpu_custom_call.1} parent=11 // pred_region
          _
        $region40: #{tpu_custom_call.1} parent=11 // pred_fallthru
          _
      $region12: #{tpu_custom_call.1} parent=5 // pred_fallthru
        _
      %p327 = scmp.lt.s32.totalorder %s26, 2
      // Predicated region
      $region41: #{tpu_custom_call.1} parent=5 // pred_check
        %p328 = pneg %p327
      $region42: #{tpu_custom_call.1} parent=5 // pred_check_branch
        %330 = sbr.rel (%p328) target = $region44
      $region43: #{tpu_custom_call.1} parent=5 // pred_region
        // Predicated region
        $region45: #{tpu_custom_call.1} parent=43 // pred_check
          %p331 = pneg %p46
        $region46: #{tpu_custom_call.1} parent=43 // pred_check_branch
          %333 = sbr.rel (%p331) target = $region48
        $region47: #{tpu_custom_call.1} parent=43 // pred_region
          %s334 = sand.u32 %s36, 1
          %s335 = scalar_lea.sflag [#allocation3], %s334
          %s336 = sand.u32 %s36, 1
          %s337 = smul.addr %s336, 8
          %s338 = scalar_lea.vmem [#allocation2], %s337
          %s340 = ssub.s32 128, 128
          %341 = vsyncadd %s335, %s340
          %s342 = smul.addr %s26, 128
          %s343 = scalar_lea.hbm %s0, %s342
          %s345 = sshll.u32 %s338, 4
          %s346 = int_to_ptr.vmem [resolvable:$true] %s345
          %348 = dma.hbm_to_vmem [thread:$0]  %s343, 128, %s346, %s335
        $region48: #{tpu_custom_call.1} parent=43 // pred_fallthru
          _
        // Predicated region
        $region49: #{tpu_custom_call.1} parent=43 // pred_check
          %p349 = pneg %p72
        $region50: #{tpu_custom_call.1} parent=43 // pred_check_branch
          %351 = sbr.rel (%p349) target = $region52
        $region51: #{tpu_custom_call.1} parent=43 // pred_region
          %s352 = sand.u32 %s26, 1
          %s353 = scalar_lea.sflag [#allocation6], %s352
          %s354 = sand.u32 %s62, 1
          %s355 = smul.addr %s354, 4
          %s356 = scalar_lea.vmem [#allocation5], %s355
          %s358 = ssub.s32 64, 64
          %359 = vsyncadd %s353, %s358
          %s360 = smul.addr %s26, 64
          %s361 = scalar_lea.hbm %s1, %s360
          %s363 = sshll.u32 %s356, 4
          %s364 = int_to_ptr.vmem [resolvable:$true] %s363
          %366 = dma.hbm_to_vmem [thread:$0]  %s361, 64, %s364, %s353
        $region52: #{tpu_custom_call.1} parent=43 // pred_fallthru
          _
      $region44: #{tpu_custom_call.1} parent=5 // pred_fallthru
        _
      %p367 = scmp.le.s32.totalorder 1, %s26
      %p368 = scmp.lt.s32.totalorder %s26, 3
      %p369 = pnand %p367, %p368
      %p370 = pneg %p369
      // Predicated region
      $region53: #{tpu_custom_call.1} parent=5 // pred_check
        _
      $region54: #{tpu_custom_call.1} parent=5 // pred_check_branch
        %372 = sbr.rel (%p369) target = $region56
      $region55: #{tpu_custom_call.1} parent=5 // pred_region
        %s373 = ssub.s32 %s26, 1
        %s374 = sand.u32 %s39, 1
        %s375 = scalar_lea.sflag [#allocation3], %s374
        %s376 = sand.u32 %s39, 1
        %s377 = smul.addr %s376, 8
        %s378 = scalar_lea.vmem [#allocation2], %s377
        // Predicated region
        $region57: #{tpu_custom_call.1} parent=55 // pred_check
          %p379 = pneg %p52
        $region58: #{tpu_custom_call.1} parent=55 // pred_check_branch
          %381 = sbr.rel (%p379) target = $region60
        $region59: #{tpu_custom_call.1} parent=55 // pred_region
          %382 = dma.done %s375, 128
        $region60: #{tpu_custom_call.1} parent=55 // pred_fallthru
          _
        %s383 = sand.u32 %s31, 1
        %s384 = scalar_lea.sflag [#allocation6], %s383
        %s385 = sand.u32 %s65, 1
        %s386 = smul.addr %s385, 4
        %s387 = scalar_lea.vmem [#allocation5], %s386
        // Predicated region
        $region61: #{tpu_custom_call.1} parent=55 // pred_check
          %p388 = pneg %p78
        $region62: #{tpu_custom_call.1} parent=55 // pred_check_branch
          %390 = sbr.rel (%p388) target = $region64
        $region63: #{tpu_custom_call.1} parent=55 // pred_region
          %391 = dma.done %s384, 64
        $region64: #{tpu_custom_call.1} parent=55 // pred_fallthru
          _
        // Predicated region
        $region65: #{tpu_custom_call.1} parent=55 // pred_check
          %p392 = pneg %p99
        $region66: #{tpu_custom_call.1} parent=55 // pred_check_branch
          %394 = sbr.rel (%p392) target = $region68
        $region67: #{tpu_custom_call.1} parent=55 // pred_region
          %395 = dma.done [#allocation6], 128
        $region68: #{tpu_custom_call.1} parent=55 // pred_fallthru
          _
        // Predicated region
        $region69: #{tpu_custom_call.1} parent=55 // pred_check
          %p396 = pneg %p120
        $region70: #{tpu_custom_call.1} parent=55 // pred_check_branch
          %398 = sbr.rel (%p396) target = $region72
        $region71: #{tpu_custom_call.1} parent=55 // pred_region
          %399 = dma.done [#allocation9], 512
        $region72: #{tpu_custom_call.1} parent=55 // pred_fallthru
          _
        // Predicated region
        $region73: #{tpu_custom_call.1} parent=55 // pred_check
          %p400 = pneg %p162
        $region74: #{tpu_custom_call.1} parent=55 // pred_check_branch
          %402 = sbr.rel (%p400) target = $region76
        $region75: #{tpu_custom_call.1} parent=55 // pred_region
          %403 = dma.done [#allocation9], 512
        $region76: #{tpu_custom_call.1} parent=55 // pred_fallthru
          _
        // Predicated region
        $region77: #{tpu_custom_call.1} parent=55 // pred_check
          %p404 = pneg %p204
        $region78: #{tpu_custom_call.1} parent=55 // pred_check_branch
          %406 = sbr.rel (%p404) target = $region80
        $region79: #{tpu_custom_call.1} parent=55 // pred_region
          %407 = dma.done [#allocation12], 512
        $region80: #{tpu_custom_call.1} parent=55 // pred_fallthru
          _
        %s408 = sand.u32 %s39, 1
        %s409 = scalar_lea.sflag [#allocation3], %s408
        %s410 = sand.u32 %s39, 1
        %s411 = smul.addr %s410, 8
        %s412 = scalar_lea.vmem [#allocation2], %s411
        %p413 = pneg %p52
        %p414 = pneg %p49
        %s415 = sand.u32 %s31, 1
        %s416 = scalar_lea.sflag [#allocation6], %s415
        %s417 = sand.u32 %s65, 1
        %s418 = smul.addr %s417, 4
        %s419 = scalar_lea.vmem [#allocation5], %s418
        %p420 = pneg %p78
        %p421 = pneg %p75
        %p422 = pneg %p99
        %p423 = pneg %p96
        %p424 = pneg %p120
        %p425 = pneg %p117
        %p426 = pneg %p141
        %p427 = pneg %p138
        %p428 = pneg %p162
        %p429 = pneg %p159
        %p430 = pneg %p183
        %p431 = pneg %p180
        %p432 = pneg %p204
        %p433 = pneg %p201
        %p434 = pneg %p225
        %p435 = pneg %p222
        %p436 = pneg %p251
        %p437 = pneg %p248
        %s438 = sand.u32 %s238, 1
        %s439 = scalar_lea.sflag [#allocation4], %s438
        %s440 = sand.u32 %s238, 1
        %s441 = smul.addr %s440, 16
        %s442 = scalar_lea.vmem [#allocation13], %s441
        %v444 = vld [vmem:[%s387] sm:$0xf]
        %v445 = vld [vmem:[#allocation7] sm:$0xf]
        %v446 = vld [vmem:[#allocation7 + $0x4] sm:$0xf]
        %v447 = vld [vmem:[%s378] sm:$0xff]
        %v448 = vld [vmem:[#allocation8] sm:$0xff]
        %v449 = vld [vmem:[#allocation8 + $0x8] sm:$0xff]
        %v450 = vld [vmem:[#allocation8 + $0x10] sm:$0xff]
        %v451 = vld [vmem:[#allocation8 + $0x18] sm:$0xff]
        %v452 = vld [vmem:[%s4] sm:$0x3]
        %v454 = vlaneseq
        %v455 = vshrl.u32 %v454, 7
        %v456 = vsub.s32 0, %v455
        %v457 = vrot.slane %v452, %v456
        %v458 = vlaneseq
        %v459 = vshrl.u32 %v458, 7
        %v460 = vsub.s32 1, %v459
        %v461 = vrot.slane %v452, %v460
        %v468 = vunpack.c.l.b16 %v448
        %v469 = vunpack.c.h.b16 %v448
        %v470 = vunpack.c.l.b16 %v449
        %v471 = vunpack.c.h.b16 %v449
        %v472 = vunpack.c.l.b16 %v450
        %v473 = vunpack.c.h.b16 %v450
        %v474 = vunpack.c.l.b16 %v451
        %v475 = vunpack.c.h.b16 %v451
        %v476 = vpack.c.b16 %v470, %v468
        %v477 = vpack.c.b16 %v471, %v469
        %v478 = vpack.c.b16 %v474, %v472
        %v479 = vpack.c.b16 %v475, %v473
        %vm484 = vcmask 261120
        %v486 = vsel %vm484, %v444, 0
        %488 = vmatprep.subr.bf16.mxu0 %v477
        %489 = vmatpush1.bf16.msra.mxu0 %v476
        %490 = vmatprep.subr.bf16.mxu0 %v479
        %491 = vmatpush1.bf16.msra.mxu0 %v478
        %492 = vmatprep.subr.bf16.mxu0 0
        %493 = vmatpush1.bf16.msra.mxu0 0
        %494 = vmatprep.subr.bf16.mxu0 0
        %495 = vmatpush1.bf16.msra.mxu0 0
        %496 = vmatprep.subr.bf16.mxu0 0
        %497 = vmatpush1.bf16.msra.mxu0 0
        %498 = vmatprep.subr.bf16.mxu0 0
        %499 = vmatpush1.bf16.msra.mxu0 0
        %500 = vmatprep.subr.bf16.mxu0 0
        %501 = vmatpush1.bf16.msra.mxu0 0
        %502 = vmatprep.subr.bf16.mxu0 0
        %503 = vmatpush1.bf16.msra.mxu0 0
        %504 = vmatprep.subr.bf16.mxu0 0
        %505 = vmatpush1.bf16.msra.mxu0 0
        %506 = vmatprep.subr.bf16.mxu0 0
        %507 = vmatpush1.bf16.msra.mxu0 0
        %508 = vmatprep.subr.bf16.mxu0 0
        %509 = vmatpush1.bf16.msra.mxu0 0
        %510 = vmatprep.subr.bf16.mxu0 0
        %511 = vmatpush1.bf16.msra.mxu0 0
        %512 = vmatprep.subr.bf16.mxu0 0
        %513 = vmatpush1.bf16.msra.mxu0 0
        %514 = vmatprep.subr.bf16.mxu0 0
        %515 = vmatpush1.bf16.msra.mxu0 0
        %516 = vmatprep.subr.bf16.mxu0 0
        %517 = vmatpush1.bf16.msra.mxu0 0
        %518 = vmatprep.subr.bf16.mxu0 0
        %519 = vmatpush1.bf16.msra.mxu0 0
        %520 = vmatprep.mubr.bf16.mxu0 0
        %521 = vmatmul.mubr.bf16.gmra.mrb[0].mxu0 %v486
        %v522 = vpop.f32.mrb[0].mxu0
        %v523 = vadd.f32 %v457, %v522
        %v524 = vpop.f32.mrb[0].mxu0
        %v525 = vadd.f32 %v461, %v524
        %v526 = vpop.f32.mrb[0].mxu0
        %v527 = vpop.f32.mrb[0].mxu0
        %528 = vdwg.mxu0
        %v529 = vpack.c.bf16 %v523, %v523
        %v530 = vpack.c.bf16 %v525, %v525
        %v531 = vld [vmem:[#allocation10] sm:$0xff]
        %v532 = vld [vmem:[#allocation10 + $0x8] sm:$0xff]
        %v533 = vld [vmem:[#allocation10 + $0x10] sm:$0xff]
        %v534 = vld [vmem:[#allocation10 + $0x18] sm:$0xff]
        %v535 = vld [vmem:[%s6] sm:$0x3]
        %v537 = vlaneseq
        %v538 = vshrl.u32 %v537, 7
        %v539 = vsub.s32 0, %v538
        %v540 = vrot.slane %v535, %v539
        %v541 = vlaneseq
        %v542 = vshrl.u32 %v541, 7
        %v543 = vsub.s32 1, %v542
        %v544 = vrot.slane %v535, %v543
        %v549 = vunpack.c.l.b16 %v445
        %v550 = vunpack.c.l.b16 %v446
        %v551 = vpack.c.b16 %v550, %v549
        %v556 = vunpack.c.l.b16 %v531
        %v557 = vunpack.c.h.b16 %v531
        %v558 = vunpack.c.l.b16 %v532
        %v559 = vunpack.c.h.b16 %v532
        %v560 = vunpack.c.l.b16 %v533
        %v561 = vunpack.c.h.b16 %v533
        %v562 = vunpack.c.l.b16 %v534
        %v563 = vunpack.c.h.b16 %v534
        %v564 = vpack.c.b16 %v558, %v556
        %v565 = vpack.c.b16 %v559, %v557
        %v566 = vpack.c.b16 %v562, %v560
        %v567 = vpack.c.b16 %v563, %v561
        %v573 = vsel %vm484, %v551, 0
        %575 = vmatprep.subr.bf16.mxu0 %v565
        %576 = vmatpush1.bf16.msra.mxu0 %v564
        %577 = vmatprep.subr.bf16.mxu0 %v567
        %578 = vmatpush1.bf16.msra.mxu0 %v566
        %579 = vmatprep.subr.bf16.mxu0 0
        %580 = vmatpush1.bf16.msra.mxu0 0
        %581 = vmatprep.subr.bf16.mxu0 0
        %582 = vmatpush1.bf16.msra.mxu0 0
        %583 = vmatprep.subr.bf16.mxu0 0
        %584 = vmatpush1.bf16.msra.mxu0 0
        %585 = vmatprep.subr.bf16.mxu0 0
        %586 = vmatpush1.bf16.msra.mxu0 0
        %587 = vmatprep.subr.bf16.mxu0 0
        %588 = vmatpush1.bf16.msra.mxu0 0
        %589 = vmatprep.subr.bf16.mxu0 0
        %590 = vmatpush1.bf16.msra.mxu0 0
        %591 = vmatprep.subr.bf16.mxu0 0
        %592 = vmatpush1.bf16.msra.mxu0 0
        %593 = vmatprep.subr.bf16.mxu0 0
        %594 = vmatpush1.bf16.msra.mxu0 0
        %595 = vmatprep.subr.bf16.mxu0 0
        %596 = vmatpush1.bf16.msra.mxu0 0
        %597 = vmatprep.subr.bf16.mxu0 0
        %598 = vmatpush1.bf16.msra.mxu0 0
        %599 = vmatprep.subr.bf16.mxu0 0
        %600 = vmatpush1.bf16.msra.mxu0 0
        %601 = vmatprep.subr.bf16.mxu0 0
        %602 = vmatpush1.bf16.msra.mxu0 0
        %603 = vmatprep.subr.bf16.mxu0 0
        %604 = vmatpush1.bf16.msra.mxu0 0
        %605 = vmatprep.subr.bf16.mxu0 0
        %606 = vmatpush1.bf16.msra.mxu0 0
        %607 = vmatprep.mubr.bf16.mxu0 0
        %608 = vmatmul.mubr.bf16.gmra.mrb[0].mxu0 %v573
        %v609 = vpop.f32.mrb[0].mxu0
        %v610 = vadd.f32 %v540, %v609
        %v611 = vpop.f32.mrb[0].mxu0
        %v612 = vadd.f32 %v544, %v611
        %v613 = vpop.f32.mrb[0].mxu0
        %v614 = vadd.f32 %v540, %v613
        %v615 = vpop.f32.mrb[0].mxu0
        %v616 = vadd.f32 %v544, %v615
        %617 = vdwg.mxu0
        %v618 = vpack.c.bf16 %v614, %v610
        %v619 = vpack.c.bf16 %v616, %v612
        %v620 = vld [vmem:[#allocation11] sm:$0xff]
        %v621 = vld [vmem:[#allocation11 + $0x8] sm:$0xff]
        %v622 = vld [vmem:[#allocation11 + $0x10] sm:$0xff]
        %v623 = vld [vmem:[#allocation11 + $0x18] sm:$0xff]
        %v624 = vld [vmem:[%s8] sm:$0x3]
        %v626 = vlaneseq
        %v627 = vshrl.u32 %v626, 7
        %v628 = vsub.s32 0, %v627
        %v629 = vrot.slane %v624, %v628
        %v630 = vlaneseq
        %v631 = vshrl.u32 %v630, 7
        %v632 = vsub.s32 1, %v631
        %v633 = vrot.slane %v624, %v632
        %v640 = vunpack.c.l.b16 %v620
        %v641 = vunpack.c.h.b16 %v620
        %v642 = vunpack.c.l.b16 %v621
        %v643 = vunpack.c.h.b16 %v621
        %v644 = vunpack.c.l.b16 %v622
        %v645 = vunpack.c.h.b16 %v622
        %v646 = vunpack.c.l.b16 %v623
        %v647 = vunpack.c.h.b16 %v623
        %v648 = vpack.c.b16 %v642, %v640
        %v649 = vpack.c.b16 %v643, %v641
        %v650 = vpack.c.b16 %v646, %v644
        %v651 = vpack.c.b16 %v647, %v645
        %656 = vmatprep.subr.bf16.mxu0 %v649
        %657 = vmatpush1.bf16.msra.mxu0 %v648
        %658 = vmatprep.subr.bf16.mxu0 %v651
        %659 = vmatpush1.bf16.msra.mxu0 %v650
        %660 = vmatprep.subr.bf16.mxu0 0
        %661 = vmatpush1.bf16.msra.mxu0 0
        %662 = vmatprep.subr.bf16.mxu0 0
        %663 = vmatpush1.bf16.msra.mxu0 0
        %664 = vmatprep.subr.bf16.mxu0 0
        %665 = vmatpush1.bf16.msra.mxu0 0
        %666 = vmatprep.subr.bf16.mxu0 0
        %667 = vmatpush1.bf16.msra.mxu0 0
        %668 = vmatprep.subr.bf16.mxu0 0
        %669 = vmatpush1.bf16.msra.mxu0 0
        %670 = vmatprep.subr.bf16.mxu0 0
        %671 = vmatpush1.bf16.msra.mxu0 0
        %672 = vmatprep.subr.bf16.mxu0 0
        %673 = vmatpush1.bf16.msra.mxu0 0
        %674 = vmatprep.subr.bf16.mxu0 0
        %675 = vmatpush1.bf16.msra.mxu0 0
        %676 = vmatprep.subr.bf16.mxu0 0
        %677 = vmatpush1.bf16.msra.mxu0 0
        %678 = vmatprep.subr.bf16.mxu0 0
        %679 = vmatpush1.bf16.msra.mxu0 0
        %680 = vmatprep.subr.bf16.mxu0 0
        %681 = vmatpush1.bf16.msra.mxu0 0
        %682 = vmatprep.subr.bf16.mxu0 0
        %683 = vmatpush1.bf16.msra.mxu0 0
        %684 = vmatprep.subr.bf16.mxu0 0
        %685 = vmatpush1.bf16.msra.mxu0 0
        %686 = vmatprep.subr.bf16.mxu0 0
        %687 = vmatpush1.bf16.msra.mxu0 0
        %688 = vmatprep.mubr.bf16.mxu0 0
        %689 = vmatmul.mubr.bf16.gmra.mrb[0].mxu0 %v573
        %v690 = vpop.f32.mrb[0].mxu0
        %v691 = vadd.f32 %v629, %v690
        %v692 = vpop.f32.mrb[0].mxu0
        %v693 = vadd.f32 %v633, %v692
        %v694 = vpop.f32.mrb[0].mxu0
        %v695 = vadd.f32 %v629, %v694
        %v696 = vpop.f32.mrb[0].mxu0
        %v697 = vadd.f32 %v633, %v696
        %698 = vdwg.mxu0
        %v699 = vpack.c.bf16 %v695, %v691
        %v700 = vpack.c.bf16 %v697, %v693
        %701 = vmatprep.subr.bf16.mxu0 0
        %702 = vmatpush1.bf16.xpose.msra.mxu0 %v618
        %703 = vmatprep.subr.bf16.mxu0 0
        %704 = vmatpush1.bf16.xpose.msra.mxu0 0
        %705 = vmatprep.subr.bf16.mxu0 0
        %706 = vmatpush1.bf16.xpose.msra.mxu0 0
        %707 = vmatprep.subr.bf16.mxu0 0
        %708 = vmatpush1.bf16.xpose.msra.mxu0 0
        %709 = vmatprep.subr.bf16.mxu0 0
        %710 = vmatpush1.bf16.xpose.msra.mxu0 0
        %711 = vmatprep.subr.bf16.mxu0 0
        %712 = vmatpush1.bf16.xpose.msra.mxu0 0
        %713 = vmatprep.subr.bf16.mxu0 0
        %714 = vmatpush1.bf16.xpose.msra.mxu0 0
        %715 = vmatprep.subr.bf16.mxu0 0
        %716 = vmatpush1.bf16.xpose.msra.mxu0 0
        %717 = vmatprep.subr.bf16.mxu0 0
        %718 = vmatpush1.bf16.xpose.msra.mxu0 0
        %719 = vmatprep.subr.bf16.mxu0 0
        %720 = vmatpush1.bf16.xpose.msra.mxu0 0
        %721 = vmatprep.subr.bf16.mxu0 0
        %722 = vmatpush1.bf16.xpose.msra.mxu0 0
        %723 = vmatprep.subr.bf16.mxu0 0
        %724 = vmatpush1.bf16.xpose.msra.mxu0 0
        %725 = vmatprep.subr.bf16.mxu0 0
        %726 = vmatpush1.bf16.xpose.msra.mxu0 0
        %727 = vmatprep.subr.bf16.mxu0 0
        %728 = vmatpush1.bf16.xpose.msra.mxu0 0
        %729 = vmatprep.subr.bf16.mxu0 0
        %730 = vmatpush1.bf16.xpose.msra.mxu0 0
        %731 = vmatprep.subr.bf16.mxu0 0
        %732 = vmatpush1.bf16.xpose.msra.mxu0 0
        %733 = vmatprep.mubr.bf16.mxu0 0
        %734 = vmatmul.mubr.bf16.gmra.mrb[0].mxu0 %v529
        %v735 = vpop.f32.mrb[0].mxu0
        %v736 = vadd.f32 %v447, %v735
        %v737 = vpop.f32.mrb[0].mxu0
        %v738 = vpop.f32.mrb[0].mxu0
        %v739 = vpop.f32.mrb[0].mxu0
        %740 = vdwg.mxu0
        %vm741 = vcmask 130048
        %v742 = vsel %vm741, %v736, -inf
        %743 = vmax.xlane.f32.xlu0 %v742
        %v744 = vpop.xlane.xlu0 %743
        %v745 = vsub.f32 %v736, %v744
        %v746 = vmul.f32 %v745, 1.442695
        %v747 = vpow.pop %v746
        %v748 = vsel %vm741, %v747, 0.0
        %749 = vadd.xlane.f32.xlu0 %v748
        %v750 = vpop.xlane.xlu0 %749
        %v751 = vrcp.pop %v750
        %v752 = vmul.f32 %v747, %v751
        %v753 = vpack.c.bf16 %v752, %v752
        %v755 = vsel %vm741, %v753, 0
        %757 = vmatprep.subr.bf16.mxu0 0
        %758 = vmatpush1.bf16.msra.mxu0 %v699
        %759 = vmatprep.subr.bf16.mxu0 0
        %760 = vmatpush1.bf16.msra.mxu0 0
        %761 = vmatprep.subr.bf16.mxu0 0
        %762 = vmatpush1.bf16.msra.mxu0 0
        %763 = vmatprep.subr.bf16.mxu0 0
        %764 = vmatpush1.bf16.msra.mxu0 0
        %765 = vmatprep.subr.bf16.mxu0 0
        %766 = vmatpush1.bf16.msra.mxu0 0
        %767 = vmatprep.subr.bf16.mxu0 0
        %768 = vmatpush1.bf16.msra.mxu0 0
        %769 = vmatprep.subr.bf16.mxu0 0
        %770 = vmatpush1.bf16.msra.mxu0 0
        %771 = vmatprep.subr.bf16.mxu0 0
        %772 = vmatpush1.bf16.msra.mxu0 0
        %773 = vmatprep.subr.bf16.mxu0 0
        %774 = vmatpush1.bf16.msra.mxu0 0
        %775 = vmatprep.subr.bf16.mxu0 0
        %776 = vmatpush1.bf16.msra.mxu0 0
        %777 = vmatprep.subr.bf16.mxu0 0
        %778 = vmatpush1.bf16.msra.mxu0 0
        %779 = vmatprep.subr.bf16.mxu0 0
        %780 = vmatpush1.bf16.msra.mxu0 0
        %781 = vmatprep.subr.bf16.mxu0 0
        %782 = vmatpush1.bf16.msra.mxu0 0
        %783 = vmatprep.subr.bf16.mxu0 0
        %784 = vmatpush1.bf16.msra.mxu0 0
        %785 = vmatprep.subr.bf16.mxu0 0
        %786 = vmatpush1.bf16.msra.mxu0 0
        %787 = vmatprep.subr.bf16.mxu0 0
        %788 = vmatpush1.bf16.msra.mxu0 0
        %789 = vmatprep.mubr.bf16.mxu0 0
        %790 = vmatmul.mubr.bf16.gmra.mrb[0].mxu0 %v755
        %v791 = vpop.f32.mrb[0].mxu0
        %v792 = vadd.f32 0.0, %v791
        %v793 = vpop.f32.mrb[0].mxu0
        %v794 = vpop.f32.mrb[0].mxu0
        %v795 = vpop.f32.mrb[0].mxu0
        %796 = vdwg.mxu0
        %797 = vmatprep.subr.bf16.mxu0 0
        %798 = vmatpush1.bf16.xpose.msra.mxu0 %v619
        %799 = vmatprep.subr.bf16.mxu0 0
        %800 = vmatpush1.bf16.xpose.msra.mxu0 0
        %801 = vmatprep.subr.bf16.mxu0 0
        %802 = vmatpush1.bf16.xpose.msra.mxu0 0
        %803 = vmatprep.subr.bf16.mxu0 0
        %804 = vmatpush1.bf16.xpose.msra.mxu0 0
        %805 = vmatprep.subr.bf16.mxu0 0
        %806 = vmatpush1.bf16.xpose.msra.mxu0 0
        %807 = vmatprep.subr.bf16.mxu0 0
        %808 = vmatpush1.bf16.xpose.msra.mxu0 0
        %809 = vmatprep.subr.bf16.mxu0 0
        %810 = vmatpush1.bf16.xpose.msra.mxu0 0
        %811 = vmatprep.subr.bf16.mxu0 0
        %812 = vmatpush1.bf16.xpose.msra.mxu0 0
        %813 = vmatprep.subr.bf16.mxu0 0
        %814 = vmatpush1.bf16.xpose.msra.mxu0 0
        %815 = vmatprep.subr.bf16.mxu0 0
        %816 = vmatpush1.bf16.xpose.msra.mxu0 0
        %817 = vmatprep.subr.bf16.mxu0 0
        %818 = vmatpush1.bf16.xpose.msra.mxu0 0
        %819 = vmatprep.subr.bf16.mxu0 0
        %820 = vmatpush1.bf16.xpose.msra.mxu0 0
        %821 = vmatprep.subr.bf16.mxu0 0
        %822 = vmatpush1.bf16.xpose.msra.mxu0 0
        %823 = vmatprep.subr.bf16.mxu0 0
        %824 = vmatpush1.bf16.xpose.msra.mxu0 0
        %825 = vmatprep.subr.bf16.mxu0 0
        %826 = vmatpush1.bf16.xpose.msra.mxu0 0
        %827 = vmatprep.subr.bf16.mxu0 0
        %828 = vmatpush1.bf16.xpose.msra.mxu0 0
        %829 = vmatprep.mubr.bf16.mxu0 0
        %830 = vmatmul.mubr.bf16.gmra.mrb[0].mxu0 %v530
        %v831 = vpop.f32.mrb[0].mxu0
        %v832 = vadd.f32 %v447, %v831
        %v833 = vpop.f32.mrb[0].mxu0
        %v834 = vpop.f32.mrb[0].mxu0
        %v835 = vpop.f32.mrb[0].mxu0
        %836 = vdwg.mxu0
        %v837 = vsel %vm741, %v832, -inf
        %838 = vmax.xlane.f32.xlu0 %v837
        %v839 = vpop.xlane.xlu0 %838
        %v840 = vsub.f32 %v832, %v839
        %v841 = vmul.f32 %v840, 1.442695
        %v842 = vpow.pop %v841
        %v843 = vsel %vm741, %v842, 0.0
        %844 = vadd.xlane.f32.xlu0 %v843
        %v845 = vpop.xlane.xlu0 %844
        %v846 = vrcp.pop %v845
        %v847 = vmul.f32 %v842, %v846
        %v848 = vpack.c.bf16 %v847, %v847
        %v850 = vsel %vm741, %v848, 0
        %852 = vmatprep.subr.bf16.mxu0 0
        %853 = vmatpush1.bf16.msra.mxu0 %v700
        %854 = vmatprep.subr.bf16.mxu0 0
        %855 = vmatpush1.bf16.msra.mxu0 0
        %856 = vmatprep.subr.bf16.mxu0 0
        %857 = vmatpush1.bf16.msra.mxu0 0
        %858 = vmatprep.subr.bf16.mxu0 0
        %859 = vmatpush1.bf16.msra.mxu0 0
        %860 = vmatprep.subr.bf16.mxu0 0
        %861 = vmatpush1.bf16.msra.mxu0 0
        %862 = vmatprep.subr.bf16.mxu0 0
        %863 = vmatpush1.bf16.msra.mxu0 0
        %864 = vmatprep.subr.bf16.mxu0 0
        %865 = vmatpush1.bf16.msra.mxu0 0
        %866 = vmatprep.subr.bf16.mxu0 0
        %867 = vmatpush1.bf16.msra.mxu0 0
        %868 = vmatprep.subr.bf16.mxu0 0
        %869 = vmatpush1.bf16.msra.mxu0 0
        %870 = vmatprep.subr.bf16.mxu0 0
        %871 = vmatpush1.bf16.msra.mxu0 0
        %872 = vmatprep.subr.bf16.mxu0 0
        %873 = vmatpush1.bf16.msra.mxu0 0
        %874 = vmatprep.subr.bf16.mxu0 0
        %875 = vmatpush1.bf16.msra.mxu0 0
        %876 = vmatprep.subr.bf16.mxu0 0
        %877 = vmatpush1.bf16.msra.mxu0 0
        %878 = vmatprep.subr.bf16.mxu0 0
        %879 = vmatpush1.bf16.msra.mxu0 0
        %880 = vmatprep.subr.bf16.mxu0 0
        %881 = vmatpush1.bf16.msra.mxu0 0
        %882 = vmatprep.subr.bf16.mxu0 0
        %883 = vmatpush1.bf16.msra.mxu0 0
        %884 = vmatprep.mubr.bf16.mxu0 0
        %885 = vmatmul.mubr.bf16.gmra.mrb[0].mxu0 %v850
        %v886 = vpop.f32.mrb[0].mxu0
        %v887 = vadd.f32 0.0, %v886
        %v888 = vpop.f32.mrb[0].mxu0
        %v889 = vpop.f32.mrb[0].mxu0
        %v890 = vpop.f32.mrb[0].mxu0
        %891 = vdwg.mxu0
        %892 = vst [vmem:[%s442] sm:$0xff] %v792
        %893 = vst [vmem:[%s442 + $0x8] sm:$0xff] %v887
        %s894 = sand.u32 %s238, 1
        %s895 = scalar_lea.sflag [#allocation4], %s894
        %s896 = sand.u32 %s238, 1
        %s897 = smul.addr %s896, 16
        %s898 = scalar_lea.vmem [#allocation13], %s897
        // Predicated region
        $region81: #{tpu_custom_call.1} parent=55 // pred_check
          %p899 = pneg %p248
        $region82: #{tpu_custom_call.1} parent=55 // pred_check_branch
          %901 = sbr.rel (%p899) target = $region84
        $region83: #{tpu_custom_call.1} parent=55 // pred_region
          %s903 = ssub.s32 256, 256
          %904 = vsyncadd %s895, %s903
          %s905 = smul.addr %s31, 2
          %s906 = smul.addr %s905, 128
          %s907 = scalar_lea.hbm %s9, %s906
          %s909 = sshll.u32 %s898, 4
          %s910 = int_to_ptr.vmem [resolvable:$true] %s909
          %912 = dma.vmem_to_hbm [thread:$0]  %s910, 256, %s907, %s895
        $region84: #{tpu_custom_call.1} parent=55 // pred_fallthru
          _
      $region56: #{tpu_custom_call.1} parent=5 // pred_fallthru
        _
      %p913 = scmp.le.s32.totalorder 2, %s26
      // Predicated region
      $region85: #{tpu_custom_call.1} parent=5 // pred_check
        %p914 = pneg %p913
      $region86: #{tpu_custom_call.1} parent=5 // pred_check_branch
        %916 = sbr.rel (%p914) target = $region88
      $region87: #{tpu_custom_call.1} parent=5 // pred_region
        %s917 = ssub.s32 %s26, 2
        // Predicated region
        $region89: #{tpu_custom_call.1} parent=87 // pred_check
          %p918 = pneg %p254
        $region90: #{tpu_custom_call.1} parent=87 // pred_check_branch
          %920 = sbr.rel (%p918) target = $region92
        $region91: #{tpu_custom_call.1} parent=87 // pred_region
          %s921 = sand.u32 %s239, 1
          %s922 = scalar_lea.sflag [#allocation4], %s921
          %s923 = sand.u32 %s239, 1
          %s924 = smul.addr %s923, 16
          %s925 = scalar_lea.vmem [#allocation13], %s924
          %926 = dma.done %s922, 256
        $region92: #{tpu_custom_call.1} parent=87 // pred_fallthru
          _
      $region88: #{tpu_custom_call.1} parent=5 // pred_fallthru
        _
    $region6: #{tpu_custom_call.1} parent=1 // loop_footer
      %s30 = sadd.s32 1, %s26
    $region7: #{tpu_custom_call.1} parent=1 // loop_footer_branch
      %25 = sbr.rel target = $region3
    $region8: #{tpu_custom_call.1} parent=1 // loop_exit
      _
    %927 = vsyncpa [#allocation3], 1
    %s928 = scalar_lea.sflag [#allocation3], 1
    %929 = vsyncpa %s928, 1
    %930 = vsyncpa [#allocation6], 1
    %s931 = scalar_lea.sflag [#allocation6], 1
    %932 = vsyncpa %s931, 1
    %933 = vsyncpa [#allocation9], 1
    %934 = vsyncpa [#allocation12], 1
    %935 = vsyncpa [#allocation4], 1
    %s936 = scalar_lea.sflag [#allocation4], 1
    %937 = vsyncpa %s936, 1

</llo_original>
